<compile_context>
chip_gen: v7x
topology: tpu7x:2x2x1
jax: 0.10.0
libtpu: 0.0.40
codegen_flags: <defaults>
</compile_context>

<pallas_src>
from functools import partial

import numpy as np
import jax
import jax.numpy as jnp
from jax.experimental import pallas as pl
from jax.experimental.pallas import tpu as pltpu

NEG_SLOPE = 0.01     # nn.LeakyReLU default
GUARD = 128          # guard columns on each side of the packed layout


# ---------------------------------------------------------------------------
# Padded-flat layout helpers (plain JAX / numpy glue, only at scale boundaries)
# ---------------------------------------------------------------------------
def _geom(N, H, W):
    Hp, Wp = H + 2, W + 2
    Lcore = N * Hp * Wp
    L = ((GUARD + Lcore + GUARD + 127) // 128) * 128
    return Hp, Wp, Lcore, L


def pack_nchw(x):
    """(N, C, H, W) -> (C, L) padded-flat layout."""
    N, C, H, W = x.shape
    _, _, Lcore, L = _geom(N, H, W)
    xp = jnp.pad(x, ((0, 0), (0, 0), (1, 1), (1, 1)))
    xf = jnp.transpose(xp, (1, 0, 2, 3)).reshape(C, Lcore)
    return jnp.pad(xf, ((0, 0), (GUARD, L - GUARD - Lcore)))


def unpack_nchw(y, N, H, W):
    """(C, L) padded-flat -> (N, C, H, W); discards padding / guard columns."""
    C = y.shape[0]
    Hp, Wp, Lcore, _ = _geom(N, H, W)
    yc = y[:, GUARD:GUARD + Lcore].reshape(C, N, Hp, Wp)
    return jnp.transpose(yc[:, :, 1:1 + H, 1:1 + W], (1, 0, 2, 3))


def make_mask(N, H, W):
    """(1, L) float mask: 1.0 at valid pixel columns, 0.0 at pad/guard columns."""
    Hp, Wp, Lcore, L = _geom(N, H, W)
    m = np.zeros((N, Hp, Wp), np.float32)
    m[:, 1:1 + H, 1:1 + W] = 1.0
    full = np.zeros((1, L), np.float32)
    full[0, GUARD:GUARD + Lcore] = m.reshape(-1)
    return jnp.asarray(full)


def space_to_depth(x, bs=2):      # TF-style channel order (bh, bw, c)
    N, C, H, W = x.shape
    x = x.reshape(N, C, H // bs, bs, W // bs, bs)
    x = jnp.transpose(x, (0, 3, 5, 1, 2, 4))
    return x.reshape(N, C * bs * bs, H // bs, W // bs)


def depth_to_space(x, bs=2):      # inverse of space_to_depth above
    N, D, H, W = x.shape
    C = D // (bs * bs)
    x = x.reshape(N, bs, bs, C, H, W)
    x = jnp.transpose(x, (0, 3, 4, 1, 5, 2))
    return x.reshape(N, C, H * bs, W * bs)


# ---------------------------------------------------------------------------
# Pallas kernels
# ---------------------------------------------------------------------------
def _leaky(x):
    return jnp.where(x > 0, x, NEG_SLOPE * x)


def _conv3x3_taps(x_full, get_w, G, Lcore, Wp):
    """3x3 'same' conv on the padded-flat layout.

    x_full : (Cin, L) bf16 value whose pad/guard columns are already zero.
    get_w  : get_w(k) -> (Cout, Cin) bf16 weight for tap k = kh*3 + kw.
    Returns the f32 (Cout, Lcore) result over the core columns [G, G+Lcore).
    """
    acc = None
    for kh in range(3):
        for kw in range(3):
            d = (kh - 1) * Wp + (kw - 1)               # lane offset of this tap
            xs = x_full[:, G + d:G + d + Lcore]
            t = jnp.dot(get_w(kh * 3 + kw), xs,
                        preferred_element_type=jnp.float32)
            acc = t if acc is None else acc + t
    return acc


def rnb_kernel(*refs, G, Lcore, Wp, has_pre, has_a):
    """Fused VunetRNB: [optional 1x1 pre-projection on x] +
    [optional a-branch: a1 = nin(lrelu(a))] + 3x3 conv over lrelu(cat[x, a1])
    (weights split per input half -> no in-kernel concat) + residual add."""
    it = iter(refs)
    x_ref = next(it)
    a_ref = next(it) if has_a else None
    pre_w = pre_b = None
    if has_pre:
        pre_w, pre_b = next(it), next(it)
    nin_w = nin_b = None
    if has_a:
        nin_w, nin_b = next(it), next(it)
    w3x = next(it)
    w3a = next(it) if has_a else None
    b3 = next(it)
    mask_ref = next(it)
    o_ref = next(it)

    valid = mask_ref[...] != 0.0                       # (1, L) bool

    x_raw = x_ref[...]
    if has_pre:                                        # fused nin / latent_nins (1x1)
        x = jnp.dot(pre_w[...], x_raw.astype(jnp.bfloat16),
                    preferred_element_type=jnp.float32) + pre_b[...]
    else:
        x = x_raw
    xm = jnp.where(valid, x, 0.0)                      # zero-padding semantics

    acc = _conv3x3_taps(_leaky(xm).astype(jnp.bfloat16),
                        lambda k: w3x[k], G, Lcore, Wp)
    if has_a:
        a1 = jnp.dot(nin_w[...], _leaky(a_ref[...]).astype(jnp.bfloat16),
                     preferred_element_type=jnp.float32) + nin_b[...]
        a1m = jnp.where(valid, a1, 0.0)
        acc = acc + _conv3x3_taps(_leaky(a1m).astype(jnp.bfloat16),
                                  lambda k: w3a[k], G, Lcore, Wp)

    o_ref[:, G:G + Lcore] = xm[:, G:G + Lcore] + acc + b3[...]


def conv3x3_kernel(x_ref, w_ref, b_ref, mask_ref, o_ref, *, G, Lcore, Wp):
    """Plain NormConv2d 3x3 (gamma/beta folded): Upsample conv and out_conv."""
    valid = mask_ref[...] != 0.0
    xm = jnp.where(valid, x_ref[...], 0.0).astype(jnp.bfloat16)
    acc = _conv3x3_taps(xm, lambda k: w_ref[k], G, Lcore, Wp)
    o_ref[:, G:G + Lcore] = acc + b_ref[...]


def auto_loop_kernel(*refs, G, Lcore, Wp, Ch, training):
    """Whole autoregressive latent loop of one scale in a single kernel:
    for l in 0..3:  p_l = auto_lp[l](p_features); z_l = p_l + eps_l;
                    p_features = auto_blocks[l+1](p_features, feedback_l).
    p_features / a1 are carried across groups in VMEM scratch."""
    it = iter(refs)
    pf_ref, eps_ref = next(it), next(it)
    lp_w, lp_b = next(it), next(it)
    nin_w, nin_b = next(it), next(it)
    c3x_w, c3a_w, c3_b = next(it), next(it), next(it)
    mask_ref = next(it)
    post_ref = next(it) if training else None
    p_out, z_out = next(it), next(it)
    pf_s, a1_s = next(it), next(it)

    valid = mask_ref[...] != 0.0

    for l in range(4):
        pf = pf_ref[...] if l == 0 else pf_s[...]              # (4*Ch, L) f32
        pf_m = jnp.where(valid, pf, 0.0)
        # p_group = auto_lp[l](p_features)  (raw 3x3 conv, no activation)
        p = _conv3x3_taps(pf_m.astype(jnp.bfloat16),
                          lambda k, l=l: lp_w[l * 9 + k], G, Lcore, Wp) + lp_b[l]
        p_out[l * Ch:(l + 1) * Ch, G:G + Lcore] = p
        # latent_sample: mean + 1.0 * eps
        z = p + eps_ref[l * Ch:(l + 1) * Ch, G:G + Lcore]
        z_out[l * Ch:(l + 1) * Ch, G:G + Lcore] = z
        if l + 1 < 4:
            fb = (post_ref[l * Ch:(l + 1) * Ch, G:G + Lcore]
                  if training else z)
            # auto_blocks[l+1]: residual VunetRNB(channels=4*nf_h, a_channels=nf_h)
            a1 = jnp.dot(nin_w[l], _leaky(fb).astype(jnp.bfloat16),
                         preferred_element_type=jnp.float32) + nin_b[l]
            a1_s[:, G:G + Lcore] = a1
            a1_m = jnp.where(valid, a1_s[...], 0.0)
            r = (_conv3x3_taps(_leaky(pf_m).astype(jnp.bfloat16),
                               lambda k, l=l: c3x_w[l * 9 + k], G, Lcore, Wp)
                 + _conv3x3_taps(_leaky(a1_m).astype(jnp.bfloat16),
                                 lambda k, l=l: c3a_w[l * 9 + k], G, Lcore, Wp)
                 + c3_b[l])
            pf_s[:, G:G + Lcore] = pf[:, G:G + Lcore] + r


# ---------------------------------------------------------------------------
# pallas_call wrappers (single-step grid; whole operands resident in VMEM)
# ---------------------------------------------------------------------------
def _vmem_specs(n):
    return [pl.BlockSpec(memory_space=pltpu.MemorySpace.VMEM) for _ in range(n)]


def call_rnb(x_p, a_p, rnb, mask, geom, pre=None):
    _, Wp, Lcore, L = geom
    C = rnb["w9x"].shape[1]
    ops = [x_p]
    if a_p is not None:
        ops.append(a_p)
    if pre is not None:
        ops += [pre["w"], pre["b"]]
    if a_p is not None:
        ops += [rnb["nin"]["w"], rnb["nin"]["b"]]
    ops.append(rnb["w9x"])
    if a_p is not None:
        ops.append(rnb["w9a"])
    ops += [rnb["b"], mask]
    return pl.pallas_call(
        partial(rnb_kernel, G=GUARD, Lcore=Lcore, Wp=Wp,
                has_pre=pre is not None, has_a=a_p is not None),
        out_shape=jax.ShapeDtypeStruct((C, L), jnp.float32),
        in_specs=_vmem_specs(len(ops)),
        out_specs=pl.BlockSpec(memory_space=pltpu.MemorySpace.VMEM),
    )(*ops)


def call_conv3x3(x_p, p3, mask, geom):
    _, Wp, Lcore, L = geom
    cout = p3["w9"].shape[1]
    ops = [x_p, p3["w9"], p3["b"], mask]
    return pl.pallas_call(
        partial(conv3x3_kernel, G=GUARD, Lcore=Lcore, Wp=Wp),
        out_shape=jax.ShapeDtypeStruct((cout, L), jnp.float32),
        in_specs=_vmem_specs(len(ops)),
        out_specs=pl.BlockSpec(memory_space=pltpu.MemorySpace.VMEM),
    )(*ops)


def call_auto_loop(pf_p, eps_p, ap, mask, geom, post_p=None):
    _, Wp, Lcore, L = geom
    C4 = ap["nin_w"].shape[1]
    Ch = ap["lp_w"].shape[1]
    ops = [pf_p, eps_p, ap["lp_w"], ap["lp_b"], ap["nin_w"], ap["nin_b"],
           ap["c3x_w"], ap["c3a_w"], ap["c3_b"], mask]
    if post_p is not None:
        ops.append(post_p)
    return pl.pallas_call(
        partial(auto_loop_kernel, G=GUARD, Lcore=Lcore, Wp=Wp, Ch=Ch,
                training=post_p is not None),
        out_shape=(jax.ShapeDtypeStruct((C4, L), jnp.float32),
                   jax.ShapeDtypeStruct((C4, L), jnp.float32)),
        in_specs=_vmem_specs(len(ops)),
        out_specs=(pl.BlockSpec(memory_space=pltpu.MemorySpace.VMEM),
                   pl.BlockSpec(memory_space=pltpu.MemorySpace.VMEM)),
        scratch_shapes=[pltpu.VMEM((C4, L), jnp.float32),
                        pltpu.VMEM((C4, L), jnp.float32)],
    )(*ops)


# ---------------------------------------------------------------------------
# Parameters: synthetic NormConv2d params + folding/prep for the kernels
# ---------------------------------------------------------------------------
def init_normconv(key, cin, cout, k):
    kw, kb, kg, ke = jax.random.split(key, 4)
    return dict(w=0.1 * jax.random.normal(kw, (cout, cin, k, k), jnp.float32),
                b=0.05 * jax.random.normal(kb, (cout,), jnp.float32),
                gamma=1.0 + 0.1 * jax.random.normal(kg, (cout,), jnp.float32),
                beta=0.05 * jax.random.normal(ke, (cout,), jnp.float32))


def _fold(p):
    """Fold NormConv2d's gamma/beta: gamma*(w@x + b) + beta."""
    w = p["gamma"][:, None, None, None] * p["w"]
    b = p["gamma"] * p["b"] + p["beta"]
    return w, b


def _taps(w):  # (Cout, Cin, 3, 3) -> (9, Cout, Cin), tap k = kh*3 + kw
    return jnp.transpose(w, (2, 3, 0, 1)).reshape(9, w.shape[0], w.shape[1])


def prep_1x1(p):
    w, b = _fold(p)
    return dict(w=w[:, :, 0, 0].astype(jnp.bfloat16), b=b.reshape(-1, 1))


def prep_3x3(p):
    w, b = _fold(p)
    return dict(w9=_taps(w).astype(jnp.bfloat16), b=b.reshape(-1, 1))


def prep_rnb(block):
    """Residual VunetRNB: split the 3x3 weight (C, 2C, 3, 3) into the x-part
    and the a-part of the channel concat (avoids an in-kernel concat)."""
    C = block["conv"]["w"].shape[0]
    w, b = _fold(block["conv"])
    w9 = _taps(w)
    return dict(nin=prep_1x1(block["nin"]),
                w9x=w9[:, :, :C].astype(jnp.bfloat16),
                w9a=w9[:, :, C:].astype(jnp.bfloat16),
                b=b.reshape(-1, 1))


def prep_rnb_plain(block):
    w, b = _fold(block["conv"])
    return dict(w9x=_taps(w).astype(jnp.bfloat16), b=b.reshape(-1, 1))


def prep_auto(clp, cb):
    """Stack the per-scale autoregressive-latent params for the fused kernel."""
    lp_w = jnp.concatenate([_taps(_fold(p)[0]) for p in clp], axis=0)
    lp_b = jnp.stack([_fold(p)[1].reshape(-1, 1) for p in clp], axis=0)
    nin_w, nin_b, c3x, c3a, c3b = [], [], [], [], []
    for blk in cb[1:]:
        wn, bn = _fold(blk["nin"])
        nin_w.append(wn[:, :, 0, 0])
        nin_b.append(bn.reshape(-1, 1))
        wc, bc = _fold(blk["conv"])
        C4 = wc.shape[0]
        w9 = _taps(wc)
        c3x.append(w9[:, :, :C4])
        c3a.append(w9[:, :, C4:])
        c3b.append(bc.reshape(-1, 1))
    return dict(lp_w=lp_w.astype(jnp.bfloat16), lp_b=lp_b,
                nin_w=jnp.stack(nin_w, 0).astype(jnp.bfloat16),
                nin_b=jnp.stack(nin_b, 0),
                c3x_w=jnp.concatenate(c3x, 0).astype(jnp.bfloat16),
                c3a_w=jnp.concatenate(c3a, 0).astype(jnp.bfloat16),
                c3_b=jnp.stack(c3b, 0))


def init_raw_params(key, *, n_scales, nf_in, nf_last, nf_out, n_latent_scales):
    keys = iter(jax.random.split(key, 128))
    nxt = lambda: next(keys)
    raw = dict(nin=init_normconv(nxt(), nf_in, nf_in, 1),
               blocks=[], latent_nins=[], auto_lp=[], auto_blocks=[], ups=[])
    nf, nf_h = nf_in, nf_in
    for i in range(n_scales):
        raw["blocks"].append(dict(nin=init_normconv(nxt(), nf, nf, 1),
                                  conv=init_normconv(nxt(), 2 * nf, nf, 3)))
        if i < n_latent_scales:
            assert nf == nf_h, "DecDown needs nf == nf_in at latent scales"
            raw["latent_nins"].append(init_normconv(nxt(), 2 * nf_h, nf_h, 1))
            raw["auto_lp"].append([init_normconv(nxt(), 4 * nf_h, nf_h, 3)
                                   for _ in range(4)])
            cb = [dict(conv=init_normconv(nxt(), nf_h, nf_h, 3))]
            for _ in range(3):
                cb.append(dict(nin=init_normconv(nxt(), nf_h, 4 * nf_h, 1),
                               conv=init_normconv(nxt(), 8 * nf_h, 4 * nf_h, 3)))
            raw["auto_blocks"].append(cb)
        raw["blocks"].append(dict(nin=init_normconv(nxt(), nf, nf, 1),
                                  conv=init_normconv(nxt(), 2 * nf, nf, 3)))
        if i + 1 < n_scales:
            out_c = min(nf_in, nf_last * 2 ** (n_scales - (i + 2)))
            raw["ups"].append(init_normconv(nxt(), nf, 4 * out_c, 3))
            nf = out_c
    raw["out_conv"] = init_normconv(nxt(), nf_last, nf_out, 3)
    return raw


def prep_params(raw):
    return dict(
        nin=prep_1x1(raw["nin"]),
        blocks=[prep_rnb(b) for b in raw["blocks"]],
        latent_nins=[prep_1x1(p) for p in raw["latent_nins"]],
        auto0=[prep_rnb_plain(cb[0]) for cb in raw["auto_blocks"]],
        auto=[prep_auto(raw["auto_lp"][i], raw["auto_blocks"][i])
              for i in range(len(raw["auto_lp"]))],
        ups=[prep_3x3(p) for p in raw["ups"]],
        out_conv=prep_3x3(raw["out_conv"]),
    )


# ---------------------------------------------------------------------------
# DecDown forward
# ---------------------------------------------------------------------------
def dec_down_forward(params, gs, zs_posterior, key, *, training,
                     n_scales, n_latent_scales):
    gs = list(gs)
    zs_posterior = list(zs_posterior)
    hs_packed, ps, zs = [], [], []

    N = gs[-1].shape[0]
    H, W = gs[-1].shape[2], gs[-1].shape[3]
    geom, mask = _geom(N, H, W), make_mask(N, H, W)

    h_p = None
    for i in range(n_scales):
        g_p = pack_nchw(gs.pop())
        if i == 0:
            # h = nin(gs[-1]); h = blocks[0](h, gs.pop())  (same tensor feeds both;
            # the 1x1 nin is fused into the RNB kernel as a pre-projection)
            h_p = call_rnb(g_p, g_p, params["blocks"][0], mask, geom,
                           pre=params["nin"])
        else:
            h_p = call_rnb(h_p, g_p, params["blocks"][2 * i], mask, geom)
        hs_packed.append((h_p, H, W))

        if i < n_latent_scales:
            # pre = auto_blocks[i][0](h); p_features = space_to_depth(pre)
            pre_p = call_rnb(h_p, None, params["auto0"][i], mask, geom)
            pfeat = space_to_depth(unpack_nchw(pre_p, N, H, W))
            Hh, Wh = H // 2, W // 2
            geom_h, mask_h = _geom(N, Hh, Wh), make_mask(N, Hh, Wh)
            pf_p = pack_nchw(pfeat)
            C4 = pfeat.shape[1]
            key, sub = jax.random.split(key)
            eps_p = jax.random.normal(sub, (C4, geom_h[3]), jnp.float32)
            post_p = (pack_nchw(space_to_depth(zs_posterior[0]))
                      if training else None)
            p_cat_p, z_cat_p = call_auto_loop(pf_p, eps_p, params["auto"][i],
                                              mask_h, geom_h, post_p)
            p = depth_to_space(unpack_nchw(p_cat_p, N, Hh, Wh))
            z_prior = depth_to_space(unpack_nchw(z_cat_p, N, Hh, Wh))
            ps.append(p)
            zs.append(z_prior)
            z = zs_posterior.pop(0) if training else z_prior
            # h = latent_nins(cat([h, z])); h = blocks[2i+1](h, gs.pop())
            hz_p = jnp.concatenate([h_p, pack_nchw(z)], axis=0)
            g2_p = pack_nchw(gs.pop())
            h_p = call_rnb(hz_p, g2_p, params["blocks"][2 * i + 1], mask, geom,
                           pre=params["latent_nins"][i])
        else:
            g2_p = pack_nchw(gs.pop())
            h_p = call_rnb(h_p, g2_p, params["blocks"][2 * i + 1], mask, geom)
        hs_packed.append((h_p, H, W))

        if i + 1 < n_scales:
            # Upsample (subpixel): 3x3 conv nf -> 4*out_c, then depth_to_space(2)
            y_p = call_conv3x3(h_p, params["ups"][i], mask, geom)
            h_up = depth_to_space(unpack_nchw(y_p, N, H, W))
            H, W = 2 * H, 2 * W
            geom, mask = _geom(N, H, W), make_mask(N, H, W)
            h_p = pack_nchw(h_up)

    assert not gs
    if training:
        assert not zs_posterior

    out_p = call_conv3x3(h_p, params["out_conv"], mask, geom)
    out_params = unpack_nchw(out_p, N, H, W)
    hs = [unpack_nchw(hp, N, hh, ww) for hp, hh, ww in hs_packed]
    return out_params, hs, ps, zs


# ---------------------------------------------------------------------------
if __name__ == "__main__":
    key = jax.random.PRNGKey(0)
    k_param, k_data, k_noise, k_chk = jax.random.split(key, 4)

    n_scales, n_latent_scales = 3, 2
    nf_in = nf_last = 8
    nf_out = 4
    batch = 2
    base = 4                                     # deepest (first-processed) resolution

    # gs: highest resolution first, deepest last (forward pops from the end).
    res = [base * 2 ** (n_scales - 1 - s) for s in range(n_scales)]   # [16, 8, 4]
    g_shapes = []
    for r in res:
        g_shapes += [(batch, nf_in, r, r)] * 2
    dkeys = jax.random.split(k_data, len(g_shapes))
    gs = tuple(jax.random.normal(dk, s, jnp.float32)
               for dk, s in zip(dkeys, g_shapes))

    raw = init_raw_params(k_param, n_scales=n_scales, nf_in=nf_in,
                          nf_last=nf_last, nf_out=nf_out,
                          n_latent_scales=n_latent_scales)
    params = prep_params(raw)

    # --- single-layer self check: packed 3x3 conv kernel vs lax.conv -------
    xchk = jax.random.normal(k_chk, (batch, nf_in, 8, 8), jnp.float32)
    p_chk = init_normconv(jax.random.fold_in(k_chk, 1), nf_in, 4 * nf_in, 3)
    out_k = unpack_nchw(
        call_conv3x3(pack_nchw(xchk), prep_3x3(p_chk), make_mask(batch, 8, 8),
                     _geom(batch, 8, 8)), batch, 8, 8)
    w_r, b_r = _fold(p_chk)
    w_bf = w_r.astype(jnp.bfloat16).astype(jnp.float32)
    x_bf = xchk.astype(jnp.bfloat16).astype(jnp.float32)
    out_r = jax.lax.conv_general_dilated(
        x_bf, w_bf, window_strides=(1, 1), padding="SAME",
        dimension_numbers=("NCHW", "OIHW", "NCHW"),
        precision=jax.lax.Precision.HIGHEST) + b_r.reshape(1, -1, 1, 1)
    err = float(jnp.max(jnp.abs(out_k - out_r)))
    assert err < 2e-3, f"conv3x3 self-check failed, max abs err {err}"

    # --- full DecDown forward (inference path) ------------------------------
    fwd = jax.jit(partial(dec_down_forward, training=False,
                          n_scales=n_scales, n_latent_scales=n_latent_scales))
    out_params, hs, ps, zs = fwd(params, gs, (), k_noise)
    jax.block_until_ready((out_params, hs, ps, zs))

    top = res[0]
    assert out_params.shape == (batch, nf_out, top, top)
    assert len(hs) == 2 * n_scales
    assert hs[0].shape == (batch, nf_in, base, base)
    assert hs[-1].shape == (batch, nf_in, top, top)
    assert len(ps) == len(zs) == n_latent_scales
    assert ps[0].shape == zs[0].shape == (batch, nf_in, base, base)
    assert ps[1].shape == zs[1].shape == (batch, nf_in, 2 * base, 2 * base)
    for t in [out_params] + hs + ps + zs:
        assert bool(jnp.all(jnp.isfinite(t)))

    print("KERNEL_OK")
</pallas_src>

<mosaic_0001>
module attributes {stable_mosaic.version = 11 : i64} {
  func.func @conv3x3_kernel(%arg0: memref<8x512xf32, #tpu.memory_space<vmem>>, %arg1: memref<9x32x8xbf16, #tpu.memory_space<vmem>>, %arg2: memref<32x1xf32, #tpu.memory_space<vmem>>, %arg3: memref<1x512xf32, #tpu.memory_space<vmem>>, %arg4: memref<32x512xf32, #tpu.memory_space<vmem>>) attributes {dimension_semantics = [], scalar_prefetch = 0 : i64, scratch_operands = 0 : i64, tpu.core_type = #tpu.core_type<tc>} {
    %c0 = arith.constant 0 : index
    %c0_0 = arith.constant 0 : index
    %0 = vector.load %arg3[%c0, %c0_0] : memref<1x512xf32, #tpu.memory_space<vmem>>, vector<1x512xf32>
    %cst = arith.constant 0.000000e+00 : f32
    %1 = vector.broadcast %cst : f32 to vector<1x512xf32>
    %2 = arith.cmpf one, %0, %1 : vector<1x512xf32>
    %c0_1 = arith.constant 0 : index
    %c0_2 = arith.constant 0 : index
    %3 = vector.load %arg0[%c0_1, %c0_2] : memref<8x512xf32, #tpu.memory_space<vmem>>, vector<8x512xf32>
    %cst_3 = arith.constant 0.000000e+00 : f32
    %4 = vector.shape_cast %2 : vector<1x512xi1> to vector<1x512xi1>
    %5 = vector.broadcast %4 : vector<1x512xi1> to vector<8x512xi1>
    %6 = vector.broadcast %cst_3 : f32 to vector<8x512xf32>
    %7 = arith.select %5, %3, %6 : vector<8x512xi1>, vector<8x512xf32>
    %8 = arith.truncf %7 : vector<8x512xf32> to vector<8x512xbf16>
    %9 = vector.extract_strided_slice %8 {offsets = [0, 117], sizes = [8, 200], strides = [1, 1]} : vector<8x512xbf16> to vector<8x200xbf16>
    %c0_4 = arith.constant 0 : index
    %c0_5 = arith.constant 0 : index
    %c0_6 = arith.constant 0 : index
    %10 = vector.load %arg1[%c0_4, %c0_5, %c0_6] : memref<9x32x8xbf16, #tpu.memory_space<vmem>>, vector<1x32x8xbf16>
    %11 = vector.shape_cast %10 : vector<1x32x8xbf16> to vector<32x8xbf16>
    %cst_7 = arith.constant dense<0.000000e+00> : vector<32x200xf32>
    %12 = tpu.matmul %11, %9, %cst_7 {dimension_numbers = #tpu.dot_dimension_numbers<[1], [0], [0], [1], [0, 0, 1, 1], [], []>} : vector<32x8xbf16>, vector<8x200xbf16>, vector<32x200xf32> -> vector<32x200xf32>
    %13 = vector.extract_strided_slice %8 {offsets = [0, 118], sizes = [8, 200], strides = [1, 1]} : vector<8x512xbf16> to vector<8x200xbf16>
    %c1 = arith.constant 1 : index
    %c0_8 = arith.constant 0 : index
    %c0_9 = arith.constant 0 : index
    %14 = vector.load %arg1[%c1, %c0_8, %c0_9] : memref<9x32x8xbf16, #tpu.memory_space<vmem>>, vector<1x32x8xbf16>
    %15 = vector.shape_cast %14 : vector<1x32x8xbf16> to vector<32x8xbf16>
    %cst_10 = arith.constant dense<0.000000e+00> : vector<32x200xf32>
    %16 = tpu.matmul %15, %13, %cst_10 {dimension_numbers = #tpu.dot_dimension_numbers<[1], [0], [0], [1], [0, 0, 1, 1], [], []>} : vector<32x8xbf16>, vector<8x200xbf16>, vector<32x200xf32> -> vector<32x200xf32>
    %17 = arith.addf %12, %16 : vector<32x200xf32>
    %18 = vector.extract_strided_slice %8 {offsets = [0, 119], sizes = [8, 200], strides = [1, 1]} : vector<8x512xbf16> to vector<8x200xbf16>
    %c2 = arith.constant 2 : index
    %c0_11 = arith.constant 0 : index
    %c0_12 = arith.constant 0 : index
    %19 = vector.load %arg1[%c2, %c0_11, %c0_12] : memref<9x32x8xbf16, #tpu.memory_space<vmem>>, vector<1x32x8xbf16>
    %20 = vector.shape_cast %19 : vector<1x32x8xbf16> to vector<32x8xbf16>
    %cst_13 = arith.constant dense<0.000000e+00> : vector<32x200xf32>
    %21 = tpu.matmul %20, %18, %cst_13 {dimension_numbers = #tpu.dot_dimension_numbers<[1], [0], [0], [1], [0, 0, 1, 1], [], []>} : vector<32x8xbf16>, vector<8x200xbf16>, vector<32x200xf32> -> vector<32x200xf32>
    %22 = arith.addf %17, %21 : vector<32x200xf32>
    %23 = vector.extract_strided_slice %8 {offsets = [0, 127], sizes = [8, 200], strides = [1, 1]} : vector<8x512xbf16> to vector<8x200xbf16>
    %c3 = arith.constant 3 : index
    %c0_14 = arith.constant 0 : index
    %c0_15 = arith.constant 0 : index
    %24 = vector.load %arg1[%c3, %c0_14, %c0_15] : memref<9x32x8xbf16, #tpu.memory_space<vmem>>, vector<1x32x8xbf16>
    %25 = vector.shape_cast %24 : vector<1x32x8xbf16> to vector<32x8xbf16>
    %cst_16 = arith.constant dense<0.000000e+00> : vector<32x200xf32>
    %26 = tpu.matmul %25, %23, %cst_16 {dimension_numbers = #tpu.dot_dimension_numbers<[1], [0], [0], [1], [0, 0, 1, 1], [], []>} : vector<32x8xbf16>, vector<8x200xbf16>, vector<32x200xf32> -> vector<32x200xf32>
    %27 = arith.addf %22, %26 : vector<32x200xf32>
    %28 = vector.extract_strided_slice %8 {offsets = [0, 128], sizes = [8, 200], strides = [1, 1]} : vector<8x512xbf16> to vector<8x200xbf16>
    %c4 = arith.constant 4 : index
    %c0_17 = arith.constant 0 : index
    %c0_18 = arith.constant 0 : index
    %29 = vector.load %arg1[%c4, %c0_17, %c0_18] : memref<9x32x8xbf16, #tpu.memory_space<vmem>>, vector<1x32x8xbf16>
    %30 = vector.shape_cast %29 : vector<1x32x8xbf16> to vector<32x8xbf16>
    %cst_19 = arith.constant dense<0.000000e+00> : vector<32x200xf32>
    %31 = tpu.matmul %30, %28, %cst_19 {dimension_numbers = #tpu.dot_dimension_numbers<[1], [0], [0], [1], [0, 0, 1, 1], [], []>} : vector<32x8xbf16>, vector<8x200xbf16>, vector<32x200xf32> -> vector<32x200xf32>
    %32 = arith.addf %27, %31 : vector<32x200xf32>
    %33 = vector.extract_strided_slice %8 {offsets = [0, 129], sizes = [8, 200], strides = [1, 1]} : vector<8x512xbf16> to vector<8x200xbf16>
    %c5 = arith.constant 5 : index
    %c0_20 = arith.constant 0 : index
    %c0_21 = arith.constant 0 : index
    %34 = vector.load %arg1[%c5, %c0_20, %c0_21] : memref<9x32x8xbf16, #tpu.memory_space<vmem>>, vector<1x32x8xbf16>
    %35 = vector.shape_cast %34 : vector<1x32x8xbf16> to vector<32x8xbf16>
    %cst_22 = arith.constant dense<0.000000e+00> : vector<32x200xf32>
    %36 = tpu.matmul %35, %33, %cst_22 {dimension_numbers = #tpu.dot_dimension_numbers<[1], [0], [0], [1], [0, 0, 1, 1], [], []>} : vector<32x8xbf16>, vector<8x200xbf16>, vector<32x200xf32> -> vector<32x200xf32>
    %37 = arith.addf %32, %36 : vector<32x200xf32>
    %38 = vector.extract_strided_slice %8 {offsets = [0, 137], sizes = [8, 200], strides = [1, 1]} : vector<8x512xbf16> to vector<8x200xbf16>
    %c6 = arith.constant 6 : index
    %c0_23 = arith.constant 0 : index
    %c0_24 = arith.constant 0 : index
    %39 = vector.load %arg1[%c6, %c0_23, %c0_24] : memref<9x32x8xbf16, #tpu.memory_space<vmem>>, vector<1x32x8xbf16>
    %40 = vector.shape_cast %39 : vector<1x32x8xbf16> to vector<32x8xbf16>
    %cst_25 = arith.constant dense<0.000000e+00> : vector<32x200xf32>
    %41 = tpu.matmul %40, %38, %cst_25 {dimension_numbers = #tpu.dot_dimension_numbers<[1], [0], [0], [1], [0, 0, 1, 1], [], []>} : vector<32x8xbf16>, vector<8x200xbf16>, vector<32x200xf32> -> vector<32x200xf32>
    %42 = arith.addf %37, %41 : vector<32x200xf32>
    %43 = vector.extract_strided_slice %8 {offsets = [0, 138], sizes = [8, 200], strides = [1, 1]} : vector<8x512xbf16> to vector<8x200xbf16>
    %c7 = arith.constant 7 : index
    %c0_26 = arith.constant 0 : index
    %c0_27 = arith.constant 0 : index
    %44 = vector.load %arg1[%c7, %c0_26, %c0_27] : memref<9x32x8xbf16, #tpu.memory_space<vmem>>, vector<1x32x8xbf16>
    %45 = vector.shape_cast %44 : vector<1x32x8xbf16> to vector<32x8xbf16>
    %cst_28 = arith.constant dense<0.000000e+00> : vector<32x200xf32>
    %46 = tpu.matmul %45, %43, %cst_28 {dimension_numbers = #tpu.dot_dimension_numbers<[1], [0], [0], [1], [0, 0, 1, 1], [], []>} : vector<32x8xbf16>, vector<8x200xbf16>, vector<32x200xf32> -> vector<32x200xf32>
    %47 = arith.addf %42, %46 : vector<32x200xf32>
    %48 = vector.extract_strided_slice %8 {offsets = [0, 139], sizes = [8, 200], strides = [1, 1]} : vector<8x512xbf16> to vector<8x200xbf16>
    %c8 = arith.constant 8 : index
    %c0_29 = arith.constant 0 : index
    %c0_30 = arith.constant 0 : index
    %49 = vector.load %arg1[%c8, %c0_29, %c0_30] : memref<9x32x8xbf16, #tpu.memory_space<vmem>>, vector<1x32x8xbf16>
    %50 = vector.shape_cast %49 : vector<1x32x8xbf16> to vector<32x8xbf16>
    %cst_31 = arith.constant dense<0.000000e+00> : vector<32x200xf32>
    %51 = tpu.matmul %50, %48, %cst_31 {dimension_numbers = #tpu.dot_dimension_numbers<[1], [0], [0], [1], [0, 0, 1, 1], [], []>} : vector<32x8xbf16>, vector<8x200xbf16>, vector<32x200xf32> -> vector<32x200xf32>
    %52 = arith.addf %47, %51 : vector<32x200xf32>
    %c0_32 = arith.constant 0 : index
    %c0_33 = arith.constant 0 : index
    %53 = vector.load %arg2[%c0_32, %c0_33] : memref<32x1xf32, #tpu.memory_space<vmem>>, vector<32x1xf32>
    %54 = vector.broadcast %53 : vector<32x1xf32> to vector<32x200xf32>
    %55 = arith.addf %52, %54 : vector<32x200xf32>
    %c0_34 = arith.constant 0 : index
    %c128 = arith.constant 128 : index
    %56 = vector.load %arg4[%c0_34, %c128] : memref<32x512xf32, #tpu.memory_space<vmem>>, vector<32x200xf32>
    tpu.vector_store %arg4[%c0_34, %c128], %55 {strides = array<i32>} : memref<32x512xf32, #tpu.memory_space<vmem>>, vector<32x200xf32>,
    return
  }
}

</mosaic_0001>

<llo_original>
// kernel: tpu_custom_call.1
$region0: #{tpu_custom_call.1}
  #allocation0 [shape = 'u32[]', space=smem, size = 0x4, offset = 0x4, fixed_abs, tag = 'smem constant byte address 0x4 - core index']
  #allocation1 [shape = 'u32[144,128]{1,0:T(1,128)}', space=vmem, size = 0x12000, scoped, tag = 'internal scratch']
  %s0 = inlined_call_operand.vmem [shape: f32[8,512], index: 0, kind: input, shape index: {}]
  %s1 = inlined_call_operand.vmem [shape: bf16[9,32,8], index: 1, kind: input, shape index: {}]
  %s2 = inlined_call_operand.vmem [shape: f32[32,1], index: 2, kind: input, shape index: {}]
  %s3 = inlined_call_operand.vmem [shape: f32[1,512], index: 3, kind: input, shape index: {}]
  %s4 = inlined_call_operand.hbm [shape: f32[32,512], index: 4, kind: output, shape index: {}]
  %s5 = sld [smem:[#allocation0]]
  $region26: #{tpu_custom_call.1} parent=0
    _
  %s7 = ssub.s32 1, %s5
  %s8 = scalar_select 0, %s7, %s5
  $region1: #{tpu_custom_call.1} parent=0
    #allocation2 [shape = 'u8[65536]{0}', space=vmem, size = 0x10000, scoped, tag = 'output window, operand 0, single buffered']
    #allocation3 [shape = 's32[1]{0}', space=sflag, size = 0x4, scoped, tag = 'scoped memory for tpu_custom_call.1']
    %9 = vsyncpa [#allocation3], 0
    // Predicated region
    $region2: #{tpu_custom_call.1} parent=1 // pred_check
      _
    $region3: #{tpu_custom_call.1} parent=1 // pred_check_branch
      %11 = sbr.rel (0) target = $region5
    $region4: #{tpu_custom_call.1} parent=1 // pred_region
      _
    $region5: #{tpu_custom_call.1} parent=1 // pred_fallthru
      _
    // Predicated region
    $region6: #{tpu_custom_call.1} parent=1 // pred_check
      _
    $region7: #{tpu_custom_call.1} parent=1 // pred_check_branch
      %13 = sbr.rel (0) target = $region9
    $region8: #{tpu_custom_call.1} parent=1 // pred_region
      _
    $region9: #{tpu_custom_call.1} parent=1 // pred_fallthru
      _
    // Predicated region
    $region10: #{tpu_custom_call.1} parent=1 // pred_check
      _
    $region11: #{tpu_custom_call.1} parent=1 // pred_check_branch
      %15 = sbr.rel (0) target = $region13
    $region12: #{tpu_custom_call.1} parent=1 // pred_region
      _
    $region13: #{tpu_custom_call.1} parent=1 // pred_fallthru
      _
    // Predicated region
    $region14: #{tpu_custom_call.1} parent=1 // pred_check
      _
    $region15: #{tpu_custom_call.1} parent=1 // pred_check_branch
      %17 = sbr.rel (0) target = $region17
    $region16: #{tpu_custom_call.1} parent=1 // pred_region
      _
    $region17: #{tpu_custom_call.1} parent=1 // pred_fallthru
      _
    %v19 = vld [vmem:[%s3] sm:$0xf]
    %vm20 = vcmp.ne.f32.partialorder %v19, 0.0
    %v21 = vld [vmem:[%s0] sm:$0xff]
    %v22 = vld [vmem:[%s0 + $0x8] sm:$0xff]
    %v23 = vld [vmem:[%s0 + $0x10] sm:$0xff]
    %v24 = vsel %vm20, 1, 0
    %v25 = vlaneseq
    %v26 = vshrl.u32 %v25, 7
    %v27 = vsub.s32 0, %v26
    %v28 = vrot.slane %v24, %v27
    %v29 = vlaneseq
    %v30 = vshrl.u32 %v29, 7
    %v31 = vsub.s32 1, %v30
    %v32 = vrot.slane %v24, %v31
    %v33 = vlaneseq
    %v34 = vshrl.u32 %v33, 7
    %v35 = vsub.s32 2, %v34
    %v36 = vrot.slane %v24, %v35
    %vm37 = vcmp.eq.s32.totalorder %v28, 1
    %vm38 = vcmp.eq.s32.totalorder %v32, 1
    %vm39 = vcmp.eq.s32.totalorder %v36, 1
    %v40 = vsel %vm37, %v21, 0.0
    %v41 = vsel %vm38, %v22, 0.0
    %v42 = vsel %vm39, %v23, 0.0
    %v43 = vpack.c.bf16 %v40, %v40
    %v44 = vpack.c.bf16 %v41, %v41
    %v45 = vpack.c.bf16 %v42, %v42
    %v46 = vld [vmem:[%s1] sm:$0xf]
    %v47 = vld [vmem:[%s1 + $0x4] sm:$0xf]
    %v48 = vld [vmem:[%s1 + $0x8] sm:$0xf]
    %v49 = vld [vmem:[%s1 + $0xc] sm:$0xf]
    %s50 = scalar_lea.vmem %s1, 16
    %v51 = vld [vmem:[%s50] sm:$0xf]
    %v52 = vld [vmem:[%s50 + $0x4] sm:$0xf]
    %v53 = vld [vmem:[%s50 + $0x8] sm:$0xf]
    %v54 = vld [vmem:[%s50 + $0xc] sm:$0xf]
    %v59 = vunpack.c.l.b16 %v51
    %v60 = vunpack.c.l.b16 %v52
    %v61 = vunpack.c.l.b16 %v53
    %v62 = vunpack.c.l.b16 %v54
    %v63 = vpack.c.b16 %v60, %v59
    %v64 = vpack.c.b16 %v62, %v61
    %68 = vrot.lane.b32.xlu0 %v43, 10
    %v69 = vpop.permute.xlu0 %68
    %70 = vrot.lane.b32.xlu0 %v44, 10
    %v71 = vpop.permute.xlu0 %70
    %72 = vrot.lane.b32.xlu0 %v45, 10
    %v73 = vpop.permute.xlu0 %72
    %vm74 = vcmask 80896
    %v75 = vsel %vm74, %v69, %v71
    %v76 = vsel %vm74, %v71, %v73
    %vm77 = vcmask 64512
    %v79 = vsel %vm77, %v63, 0
    %v82 = vsel %vm77, %v64, 0
    %vm84 = vcmask 1043456
    %v86 = vsel %vm84, %v75, 0
    %v89 = vsel %vm84, %v76, 0
    %91 = vmatprep.subr.bf16.mxu0 %v89
    %92 = vmatpush1.bf16.msra.mxu0 %v86
    %93 = vmatprep.subr.bf16.mxu0 0
    %94 = vmatpush1.bf16.msra.mxu0 0
    %95 = vmatprep.subr.bf16.mxu0 0
    %96 = vmatpush1.bf16.msra.mxu0 0
    %97 = vmatprep.subr.bf16.mxu0 0
    %98 = vmatpush1.bf16.msra.mxu0 0
    %99 = vmatprep.subr.bf16.mxu0 0
    %100 = vmatpush1.bf16.msra.mxu0 0
    %101 = vmatprep.subr.bf16.mxu0 0
    %102 = vmatpush1.bf16.msra.mxu0 0
    %103 = vmatprep.subr.bf16.mxu0 0
    %104 = vmatpush1.bf16.msra.mxu0 0
    %105 = vmatprep.subr.bf16.mxu0 0
    %106 = vmatpush1.bf16.msra.mxu0 0
    %107 = vmatprep.subr.bf16.mxu0 0
    %108 = vmatpush1.bf16.msra.mxu0 0
    %109 = vmatprep.subr.bf16.mxu0 0
    %110 = vmatpush1.bf16.msra.mxu0 0
    %111 = vmatprep.subr.bf16.mxu0 0
    %112 = vmatpush1.bf16.msra.mxu0 0
    %113 = vmatprep.subr.bf16.mxu0 0
    %114 = vmatpush1.bf16.msra.mxu0 0
    %115 = vmatprep.subr.bf16.mxu0 0
    %116 = vmatpush1.bf16.msra.mxu0 0
    %117 = vmatprep.subr.bf16.mxu0 0
    %118 = vmatpush1.bf16.msra.mxu0 0
    %119 = vmatprep.subr.bf16.mxu0 0
    %120 = vmatpush1.bf16.msra.mxu0 0
    %121 = vmatprep.subr.bf16.mxu0 0
    %122 = vmatpush1.bf16.msra.mxu0 0
    %123 = vmatprep.mubr.bf16.mxu0 0
    %124 = vmatmul.mubr.bf16.gmra.mrb[0].mxu0 %v79
    %v125 = vpop.f32.mrb[0].mxu0
    %v126 = vadd.f32 0.0, %v125
    %v127 = vpop.f32.mrb[0].mxu0
    %v128 = vadd.f32 0.0, %v127
    %v129 = vpop.f32.mrb[0].mxu0
    %v130 = vadd.f32 0.0, %v129
    %v131 = vpop.f32.mrb[0].mxu0
    %v132 = vadd.f32 0.0, %v131
    %133 = vmatprep.mubr.bf16.mxu0 0
    %134 = vmatmul.mubr.bf16.gmra.mrb[0].mxu0 %v82
    %v135 = vpop.f32.mrb[0].mxu0
    %v136 = vadd.f32 0.0, %v135
    %v137 = vpop.f32.mrb[0].mxu0
    %v138 = vadd.f32 0.0, %v137
    %v139 = vpop.f32.mrb[0].mxu0
    %v140 = vadd.f32 0.0, %v139
    %v141 = vpop.f32.mrb[0].mxu0
    %v142 = vadd.f32 0.0, %v141
    %143 = vdwg.mxu0
    %v148 = vunpack.c.l.b16 %v46
    %v149 = vunpack.c.l.b16 %v47
    %v150 = vunpack.c.l.b16 %v48
    %v151 = vunpack.c.l.b16 %v49
    %v152 = vpack.c.b16 %v149, %v148
    %v153 = vpack.c.b16 %v151, %v150
    %154 = vrot.lane.b32.xlu0 %v43, 11
    %v155 = vpop.permute.xlu0 %154
    %156 = vrot.lane.b32.xlu0 %v44, 11
    %v157 = vpop.permute.xlu0 %156
    %158 = vrot.lane.b32.xlu0 %v45, 11
    %v159 = vpop.permute.xlu0 %158
    %vm160 = vcmask 89088
    %v161 = vsel %vm160, %v155, %v157
    %v162 = vsel %vm160, %v157, %v159
    %v164 = vsel %vm77, %v152, 0
    %v167 = vsel %vm77, %v153, 0
    %v170 = vsel %vm84, %v161, 0
    %v173 = vsel %vm84, %v162, 0
    %175 = vmatprep.subr.bf16.mxu0 %v173
    %176 = vmatpush1.bf16.msra.mxu0 %v170
    %177 = vmatprep.subr.bf16.mxu0 0
    %178 = vmatpush1.bf16.msra.mxu0 0
    %179 = vmatprep.subr.bf16.mxu0 0
    %180 = vmatpush1.bf16.msra.mxu0 0
    %181 = vmatprep.subr.bf16.mxu0 0
    %182 = vmatpush1.bf16.msra.mxu0 0
    %183 = vmatprep.subr.bf16.mxu0 0
    %184 = vmatpush1.bf16.msra.mxu0 0
    %185 = vmatprep.subr.bf16.mxu0 0
    %186 = vmatpush1.bf16.msra.mxu0 0
    %187 = vmatprep.subr.bf16.mxu0 0
    %188 = vmatpush1.bf16.msra.mxu0 0
    %189 = vmatprep.subr.bf16.mxu0 0
    %190 = vmatpush1.bf16.msra.mxu0 0
    %191 = vmatprep.subr.bf16.mxu0 0
    %192 = vmatpush1.bf16.msra.mxu0 0
    %193 = vmatprep.subr.bf16.mxu0 0
    %194 = vmatpush1.bf16.msra.mxu0 0
    %195 = vmatprep.subr.bf16.mxu0 0
    %196 = vmatpush1.bf16.msra.mxu0 0
    %197 = vmatprep.subr.bf16.mxu0 0
    %198 = vmatpush1.bf16.msra.mxu0 0
    %199 = vmatprep.subr.bf16.mxu0 0
    %200 = vmatpush1.bf16.msra.mxu0 0
    %201 = vmatprep.subr.bf16.mxu0 0
    %202 = vmatpush1.bf16.msra.mxu0 0
    %203 = vmatprep.subr.bf16.mxu0 0
    %204 = vmatpush1.bf16.msra.mxu0 0
    %205 = vmatprep.subr.bf16.mxu0 0
    %206 = vmatpush1.bf16.msra.mxu0 0
    %207 = vmatprep.mubr.bf16.mxu0 0
    %208 = vmatmul.mubr.bf16.gmra.mrb[0].mxu0 %v164
    %v209 = vpop.f32.mrb[0].mxu0
    %v210 = vadd.f32 %v126, %v209
    %v211 = vpop.f32.mrb[0].mxu0
    %v212 = vadd.f32 %v128, %v211
    %v213 = vpop.f32.mrb[0].mxu0
    %v214 = vadd.f32 %v130, %v213
    %v215 = vpop.f32.mrb[0].mxu0
    %v216 = vadd.f32 %v132, %v215
    %217 = vmatprep.mubr.bf16.mxu0 0
    %218 = vmatmul.mubr.bf16.gmra.mrb[0].mxu0 %v167
    %v219 = vpop.f32.mrb[0].mxu0
    %v220 = vadd.f32 %v136, %v219
    %v221 = vpop.f32.mrb[0].mxu0
    %v222 = vadd.f32 %v138, %v221
    %v223 = vpop.f32.mrb[0].mxu0
    %v224 = vadd.f32 %v140, %v223
    %v225 = vpop.f32.mrb[0].mxu0
    %v226 = vadd.f32 %v142, %v225
    %227 = vdwg.mxu0
    %s228 = scalar_lea.vmem %s1, 32
    %v229 = vld [vmem:[%s228] sm:$0xf]
    %v230 = vld [vmem:[%s228 + $0x4] sm:$0xf]
    %v231 = vld [vmem:[%s228 + $0x8] sm:$0xf]
    %v232 = vld [vmem:[%s228 + $0xc] sm:$0xf]
    %v237 = vunpack.c.l.b16 %v229
    %v238 = vunpack.c.l.b16 %v230
    %v239 = vunpack.c.l.b16 %v231
    %v240 = vunpack.c.l.b16 %v232
    %v241 = vpack.c.b16 %v238, %v237
    %v242 = vpack.c.b16 %v240, %v239
    %243 = vrot.lane.b32.xlu0 %v43, 9
    %v244 = vpop.permute.xlu0 %243
    %245 = vrot.lane.b32.xlu0 %v44, 9
    %v246 = vpop.permute.xlu0 %245
    %247 = vrot.lane.b32.xlu0 %v45, 9
    %v248 = vpop.permute.xlu0 %247
    %vm249 = vcmask 72704
    %v250 = vsel %vm249, %v244, %v246
    %v251 = vsel %vm249, %v246, %v248
    %v253 = vsel %vm77, %v241, 0
    %v256 = vsel %vm77, %v242, 0
    %v259 = vsel %vm84, %v250, 0
    %v262 = vsel %vm84, %v251, 0
    %264 = vmatprep.subr.bf16.mxu0 %v262
    %265 = vmatpush1.bf16.msra.mxu0 %v259
    %266 = vmatprep.subr.bf16.mxu0 0
    %267 = vmatpush1.bf16.msra.mxu0 0
    %268 = vmatprep.subr.bf16.mxu0 0
    %269 = vmatpush1.bf16.msra.mxu0 0
    %270 = vmatprep.subr.bf16.mxu0 0
    %271 = vmatpush1.bf16.msra.mxu0 0
    %272 = vmatprep.subr.bf16.mxu0 0
    %273 = vmatpush1.bf16.msra.mxu0 0
    %274 = vmatprep.subr.bf16.mxu0 0
    %275 = vmatpush1.bf16.msra.mxu0 0
    %276 = vmatprep.subr.bf16.mxu0 0
    %277 = vmatpush1.bf16.msra.mxu0 0
    %278 = vmatprep.subr.bf16.mxu0 0
    %279 = vmatpush1.bf16.msra.mxu0 0
    %280 = vmatprep.subr.bf16.mxu0 0
    %281 = vmatpush1.bf16.msra.mxu0 0
    %282 = vmatprep.subr.bf16.mxu0 0
    %283 = vmatpush1.bf16.msra.mxu0 0
    %284 = vmatprep.subr.bf16.mxu0 0
    %285 = vmatpush1.bf16.msra.mxu0 0
    %286 = vmatprep.subr.bf16.mxu0 0
    %287 = vmatpush1.bf16.msra.mxu0 0
    %288 = vmatprep.subr.bf16.mxu0 0
    %289 = vmatpush1.bf16.msra.mxu0 0
    %290 = vmatprep.subr.bf16.mxu0 0
    %291 = vmatpush1.bf16.msra.mxu0 0
    %292 = vmatprep.subr.bf16.mxu0 0
    %293 = vmatpush1.bf16.msra.mxu0 0
    %294 = vmatprep.subr.bf16.mxu0 0
    %295 = vmatpush1.bf16.msra.mxu0 0
    %296 = vmatprep.mubr.bf16.mxu0 0
    %297 = vmatmul.mubr.bf16.gmra.mrb[0].mxu0 %v253
    %v298 = vpop.f32.mrb[0].mxu0
    %v299 = vadd.f32 0.0, %v298
    %v300 = vpop.f32.mrb[0].mxu0
    %v301 = vadd.f32 0.0, %v300
    %v302 = vpop.f32.mrb[0].mxu0
    %v303 = vadd.f32 0.0, %v302
    %v304 = vpop.f32.mrb[0].mxu0
    %v305 = vadd.f32 0.0, %v304
    %306 = vmatprep.mubr.bf16.mxu0 0
    %307 = vmatmul.mubr.bf16.gmra.mrb[0].mxu0 %v256
    %v308 = vpop.f32.mrb[0].mxu0
    %v309 = vadd.f32 0.0, %v308
    %v310 = vpop.f32.mrb[0].mxu0
    %v311 = vadd.f32 0.0, %v310
    %v312 = vpop.f32.mrb[0].mxu0
    %v313 = vadd.f32 0.0, %v312
    %v314 = vpop.f32.mrb[0].mxu0
    %v315 = vadd.f32 0.0, %v314
    %316 = vdwg.mxu0
    %v317 = vadd.f32 %v210, %v299
    %v318 = vadd.f32 %v212, %v301
    %v319 = vadd.f32 %v214, %v303
    %v320 = vadd.f32 %v216, %v305
    %v321 = vadd.f32 %v220, %v309
    %v322 = vadd.f32 %v222, %v311
    %v323 = vadd.f32 %v224, %v313
    %v324 = vadd.f32 %v226, %v315
    %s325 = scalar_lea.vmem %s1, 48
    %v326 = vld [vmem:[%s325] sm:$0xf]
    %v327 = vld [vmem:[%s325 + $0x4] sm:$0xf]
    %v328 = vld [vmem:[%s325 + $0x8] sm:$0xf]
    %v329 = vld [vmem:[%s325 + $0xc] sm:$0xf]
    %v334 = vunpack.c.l.b16 %v326
    %v335 = vunpack.c.l.b16 %v327
    %v336 = vunpack.c.l.b16 %v328
    %v337 = vunpack.c.l.b16 %v329
    %v338 = vpack.c.b16 %v335, %v334
    %v339 = vpack.c.b16 %v337, %v336
    %340 = vrot.lane.b32.xlu0 %v43, 1
    %v341 = vpop.permute.xlu0 %340
    %342 = vrot.lane.b32.xlu0 %v44, 1
    %v343 = vpop.permute.xlu0 %342
    %344 = vrot.lane.b32.xlu0 %v45, 1
    %v345 = vpop.permute.xlu0 %344
    %vm346 = vcmask 7168
    %v347 = vsel %vm346, %v341, %v343
    %v348 = vsel %vm346, %v343, %v345
    %v350 = vsel %vm77, %v338, 0
    %v353 = vsel %vm77, %v339, 0
    %v356 = vsel %vm84, %v347, 0
    %v359 = vsel %vm84, %v348, 0
    %361 = vmatprep.subr.bf16.mxu0 %v359
    %362 = vmatpush1.bf16.msra.mxu0 %v356
    %363 = vmatprep.subr.bf16.mxu0 0
    %364 = vmatpush1.bf16.msra.mxu0 0
    %365 = vmatprep.subr.bf16.mxu0 0
    %366 = vmatpush1.bf16.msra.mxu0 0
    %367 = vmatprep.subr.bf16.mxu0 0
    %368 = vmatpush1.bf16.msra.mxu0 0
    %369 = vmatprep.subr.bf16.mxu0 0
    %370 = vmatpush1.bf16.msra.mxu0 0
    %371 = vmatprep.subr.bf16.mxu0 0
    %372 = vmatpush1.bf16.msra.mxu0 0
    %373 = vmatprep.subr.bf16.mxu0 0
    %374 = vmatpush1.bf16.msra.mxu0 0
    %375 = vmatprep.subr.bf16.mxu0 0
    %376 = vmatpush1.bf16.msra.mxu0 0
    %377 = vmatprep.subr.bf16.mxu0 0
    %378 = vmatpush1.bf16.msra.mxu0 0
    %379 = vmatprep.subr.bf16.mxu0 0
    %380 = vmatpush1.bf16.msra.mxu0 0
    %381 = vmatprep.subr.bf16.mxu0 0
    %382 = vmatpush1.bf16.msra.mxu0 0
    %383 = vmatprep.subr.bf16.mxu0 0
    %384 = vmatpush1.bf16.msra.mxu0 0
    %385 = vmatprep.subr.bf16.mxu0 0
    %386 = vmatpush1.bf16.msra.mxu0 0
    %387 = vmatprep.subr.bf16.mxu0 0
    %388 = vmatpush1.bf16.msra.mxu0 0
    %389 = vmatprep.subr.bf16.mxu0 0
    %390 = vmatpush1.bf16.msra.mxu0 0
    %391 = vmatprep.subr.bf16.mxu0 0
    %392 = vmatpush1.bf16.msra.mxu0 0
    %393 = vmatprep.mubr.bf16.mxu0 0
    %394 = vmatmul.mubr.bf16.gmra.mrb[0].mxu0 %v350
    %v395 = vpop.f32.mrb[0].mxu0
    %v396 = vadd.f32 0.0, %v395
    %v397 = vpop.f32.mrb[0].mxu0
    %v398 = vadd.f32 0.0, %v397
    %v399 = vpop.f32.mrb[0].mxu0
    %v400 = vadd.f32 0.0, %v399
    %v401 = vpop.f32.mrb[0].mxu0
    %v402 = vadd.f32 0.0, %v401
    %403 = vmatprep.mubr.bf16.mxu0 0
    %404 = vmatmul.mubr.bf16.gmra.mrb[0].mxu0 %v353
    %v405 = vpop.f32.mrb[0].mxu0
    %v406 = vadd.f32 0.0, %v405
    %v407 = vpop.f32.mrb[0].mxu0
    %v408 = vadd.f32 0.0, %v407
    %v409 = vpop.f32.mrb[0].mxu0
    %v410 = vadd.f32 0.0, %v409
    %v411 = vpop.f32.mrb[0].mxu0
    %v412 = vadd.f32 0.0, %v411
    %413 = vdwg.mxu0
    %v414 = vadd.f32 %v317, %v396
    %v415 = vadd.f32 %v318, %v398
    %v416 = vadd.f32 %v319, %v400
    %v417 = vadd.f32 %v320, %v402
    %v418 = vadd.f32 %v321, %v406
    %v419 = vadd.f32 %v322, %v408
    %v420 = vadd.f32 %v323, %v410
    %v421 = vadd.f32 %v324, %v412
    %s422 = scalar_lea.vmem %s1, 64
    %v423 = vld [vmem:[%s422] sm:$0xf]
    %v424 = vld [vmem:[%s422 + $0x4] sm:$0xf]
    %v425 = vld [vmem:[%s422 + $0x8] sm:$0xf]
    %v426 = vld [vmem:[%s422 + $0xc] sm:$0xf]
    %v431 = vunpack.c.l.b16 %v423
    %v432 = vunpack.c.l.b16 %v424
    %v433 = vunpack.c.l.b16 %v425
    %v434 = vunpack.c.l.b16 %v426
    %v435 = vpack.c.b16 %v432, %v431
    %v436 = vpack.c.b16 %v434, %v433
    %v438 = vsel %vm77, %v435, 0
    %v441 = vsel %vm77, %v436, 0
    %v444 = vsel %vm84, %v44, 0
    %v447 = vsel %vm84, %v45, 0
    %449 = vmatprep.subr.bf16.mxu0 %v447
    %450 = vmatpush1.bf16.msra.mxu0 %v444
    %451 = vmatprep.subr.bf16.mxu0 0
    %452 = vmatpush1.bf16.msra.mxu0 0
    %453 = vmatprep.subr.bf16.mxu0 0
    %454 = vmatpush1.bf16.msra.mxu0 0
    %455 = vmatprep.subr.bf16.mxu0 0
    %456 = vmatpush1.bf16.msra.mxu0 0
    %457 = vmatprep.subr.bf16.mxu0 0
    %458 = vmatpush1.bf16.msra.mxu0 0
    %459 = vmatprep.subr.bf16.mxu0 0
    %460 = vmatpush1.bf16.msra.mxu0 0
    %461 = vmatprep.subr.bf16.mxu0 0
    %462 = vmatpush1.bf16.msra.mxu0 0
    %463 = vmatprep.subr.bf16.mxu0 0
    %464 = vmatpush1.bf16.msra.mxu0 0
    %465 = vmatprep.subr.bf16.mxu0 0
    %466 = vmatpush1.bf16.msra.mxu0 0
    %467 = vmatprep.subr.bf16.mxu0 0
    %468 = vmatpush1.bf16.msra.mxu0 0
    %469 = vmatprep.subr.bf16.mxu0 0
    %470 = vmatpush1.bf16.msra.mxu0 0
    %471 = vmatprep.subr.bf16.mxu0 0
    %472 = vmatpush1.bf16.msra.mxu0 0
    %473 = vmatprep.subr.bf16.mxu0 0
    %474 = vmatpush1.bf16.msra.mxu0 0
    %475 = vmatprep.subr.bf16.mxu0 0
    %476 = vmatpush1.bf16.msra.mxu0 0
    %477 = vmatprep.subr.bf16.mxu0 0
    %478 = vmatpush1.bf16.msra.mxu0 0
    %479 = vmatprep.subr.bf16.mxu0 0
    %480 = vmatpush1.bf16.msra.mxu0 0
    %481 = vmatprep.mubr.bf16.mxu0 0
    %482 = vmatmul.mubr.bf16.gmra.mrb[0].mxu0 %v438
    %v483 = vpop.f32.mrb[0].mxu0
    %v484 = vadd.f32 0.0, %v483
    %v485 = vpop.f32.mrb[0].mxu0
    %v486 = vadd.f32 0.0, %v485
    %v487 = vpop.f32.mrb[0].mxu0
    %v488 = vadd.f32 0.0, %v487
    %v489 = vpop.f32.mrb[0].mxu0
    %v490 = vadd.f32 0.0, %v489
    %491 = vmatprep.mubr.bf16.mxu0 0
    %492 = vmatmul.mubr.bf16.gmra.mrb[0].mxu0 %v441
    %v493 = vpop.f32.mrb[0].mxu0
    %v494 = vadd.f32 0.0, %v493
    %v495 = vpop.f32.mrb[0].mxu0
    %v496 = vadd.f32 0.0, %v495
    %v497 = vpop.f32.mrb[0].mxu0
    %v498 = vadd.f32 0.0, %v497
    %v499 = vpop.f32.mrb[0].mxu0
    %v500 = vadd.f32 0.0, %v499
    %501 = vdwg.mxu0
    %v502 = vadd.f32 %v414, %v484
    %v503 = vadd.f32 %v415, %v486
    %v504 = vadd.f32 %v416, %v488
    %v505 = vadd.f32 %v417, %v490
    %v506 = vadd.f32 %v418, %v494
    %v507 = vadd.f32 %v419, %v496
    %v508 = vadd.f32 %v420, %v498
    %v509 = vadd.f32 %v421, %v500
    %s510 = scalar_lea.vmem %s1, 80
    %v511 = vld [vmem:[%s510] sm:$0xf]
    %v512 = vld [vmem:[%s510 + $0x4] sm:$0xf]
    %v513 = vld [vmem:[%s510 + $0x8] sm:$0xf]
    %v514 = vld [vmem:[%s510 + $0xc] sm:$0xf]
    %v519 = vunpack.c.l.b16 %v511
    %v520 = vunpack.c.l.b16 %v512
    %v521 = vunpack.c.l.b16 %v513
    %v522 = vunpack.c.l.b16 %v514
    %v523 = vpack.c.b16 %v520, %v519
    %v524 = vpack.c.b16 %v522, %v521
    %525 = vrot.lane.b32.xlu0 %v44, 127
    %v526 = vpop.permute.xlu0 %525
    %527 = vrot.lane.b32.xlu0 %v45, 127
    %v528 = vpop.permute.xlu0 %527
    %vm529 = vcmask 1039360
    %v530 = vsel %vm529, %v526, %v528
    %v532 = vsel %vm77, %v523, 0
    %v535 = vsel %vm77, %v524, 0
    %v538 = vsel %vm84, %v530, 0
    %v541 = vsel %vm84, %v528, 0
    %543 = vmatprep.subr.bf16.mxu0 %v541
    %544 = vmatpush1.bf16.msra.mxu0 %v538
    %545 = vmatprep.subr.bf16.mxu0 0
    %546 = vmatpush1.bf16.msra.mxu0 0
    %547 = vmatprep.subr.bf16.mxu0 0
    %548 = vmatpush1.bf16.msra.mxu0 0
    %549 = vmatprep.subr.bf16.mxu0 0
    %550 = vmatpush1.bf16.msra.mxu0 0
    %551 = vmatprep.subr.bf16.mxu0 0
    %552 = vmatpush1.bf16.msra.mxu0 0
    %553 = vmatprep.subr.bf16.mxu0 0
    %554 = vmatpush1.bf16.msra.mxu0 0
    %555 = vmatprep.subr.bf16.mxu0 0
    %556 = vmatpush1.bf16.msra.mxu0 0
    %557 = vmatprep.subr.bf16.mxu0 0
    %558 = vmatpush1.bf16.msra.mxu0 0
    %559 = vmatprep.subr.bf16.mxu0 0
    %560 = vmatpush1.bf16.msra.mxu0 0
    %561 = vmatprep.subr.bf16.mxu0 0
    %562 = vmatpush1.bf16.msra.mxu0 0
    %563 = vmatprep.subr.bf16.mxu0 0
    %564 = vmatpush1.bf16.msra.mxu0 0
    %565 = vmatprep.subr.bf16.mxu0 0
    %566 = vmatpush1.bf16.msra.mxu0 0
    %567 = vmatprep.subr.bf16.mxu0 0
    %568 = vmatpush1.bf16.msra.mxu0 0
    %569 = vmatprep.subr.bf16.mxu0 0
    %570 = vmatpush1.bf16.msra.mxu0 0
    %571 = vmatprep.subr.bf16.mxu0 0
    %572 = vmatpush1.bf16.msra.mxu0 0
    %573 = vmatprep.subr.bf16.mxu0 0
    %574 = vmatpush1.bf16.msra.mxu0 0
    %575 = vmatprep.mubr.bf16.mxu0 0
    %576 = vmatmul.mubr.bf16.gmra.mrb[0].mxu0 %v532
    %v577 = vpop.f32.mrb[0].mxu0
    %v578 = vadd.f32 0.0, %v577
    %v579 = vpop.f32.mrb[0].mxu0
    %v580 = vadd.f32 0.0, %v579
    %v581 = vpop.f32.mrb[0].mxu0
    %v582 = vadd.f32 0.0, %v581
    %v583 = vpop.f32.mrb[0].mxu0
    %v584 = vadd.f32 0.0, %v583
    %585 = vmatprep.mubr.bf16.mxu0 0
    %586 = vmatmul.mubr.bf16.gmra.mrb[0].mxu0 %v535
    %v587 = vpop.f32.mrb[0].mxu0
    %v588 = vadd.f32 0.0, %v587
    %v589 = vpop.f32.mrb[0].mxu0
    %v590 = vadd.f32 0.0, %v589
    %v591 = vpop.f32.mrb[0].mxu0
    %v592 = vadd.f32 0.0, %v591
    %v593 = vpop.f32.mrb[0].mxu0
    %v594 = vadd.f32 0.0, %v593
    %595 = vdwg.mxu0
    %v596 = vadd.f32 %v502, %v578
    %v597 = vadd.f32 %v503, %v580
    %v598 = vadd.f32 %v504, %v582
    %v599 = vadd.f32 %v505, %v584
    %v600 = vadd.f32 %v506, %v588
    %v601 = vadd.f32 %v507, %v590
    %v602 = vadd.f32 %v508, %v592
    %v603 = vadd.f32 %v509, %v594
    %s604 = scalar_lea.vmem %s1, 96
    %v605 = vld [vmem:[%s604] sm:$0xf]
    %v606 = vld [vmem:[%s604 + $0x4] sm:$0xf]
    %v607 = vld [vmem:[%s604 + $0x8] sm:$0xf]
    %v608 = vld [vmem:[%s604 + $0xc] sm:$0xf]
    %v613 = vunpack.c.l.b16 %v605
    %v614 = vunpack.c.l.b16 %v606
    %v615 = vunpack.c.l.b16 %v607
    %v616 = vunpack.c.l.b16 %v608
    %v617 = vpack.c.b16 %v614, %v613
    %v618 = vpack.c.b16 %v616, %v615
    %619 = vrot.lane.b32.xlu0 %v44, 119
    %v620 = vpop.permute.xlu0 %619
    %621 = vrot.lane.b32.xlu0 %v45, 119
    %v622 = vpop.permute.xlu0 %621
    %vm623 = vcmask 973824
    %v624 = vsel %vm623, %v620, %v622
    %v626 = vsel %vm77, %v617, 0
    %v629 = vsel %vm77, %v618, 0
    %v632 = vsel %vm84, %v624, 0
    %v635 = vsel %vm84, %v622, 0
    %637 = vmatprep.subr.bf16.mxu0 %v635
    %638 = vmatpush1.bf16.msra.mxu0 %v632
    %639 = vmatprep.subr.bf16.mxu0 0
    %640 = vmatpush1.bf16.msra.mxu0 0
    %641 = vmatprep.subr.bf16.mxu0 0
    %642 = vmatpush1.bf16.msra.mxu0 0
    %643 = vmatprep.subr.bf16.mxu0 0
    %644 = vmatpush1.bf16.msra.mxu0 0
    %645 = vmatprep.subr.bf16.mxu0 0
    %646 = vmatpush1.bf16.msra.mxu0 0
    %647 = vmatprep.subr.bf16.mxu0 0
    %648 = vmatpush1.bf16.msra.mxu0 0
    %649 = vmatprep.subr.bf16.mxu0 0
    %650 = vmatpush1.bf16.msra.mxu0 0
    %651 = vmatprep.subr.bf16.mxu0 0
    %652 = vmatpush1.bf16.msra.mxu0 0
    %653 = vmatprep.subr.bf16.mxu0 0
    %654 = vmatpush1.bf16.msra.mxu0 0
    %655 = vmatprep.subr.bf16.mxu0 0
    %656 = vmatpush1.bf16.msra.mxu0 0
    %657 = vmatprep.subr.bf16.mxu0 0
    %658 = vmatpush1.bf16.msra.mxu0 0
    %659 = vmatprep.subr.bf16.mxu0 0
    %660 = vmatpush1.bf16.msra.mxu0 0
    %661 = vmatprep.subr.bf16.mxu0 0
    %662 = vmatpush1.bf16.msra.mxu0 0
    %663 = vmatprep.subr.bf16.mxu0 0
    %664 = vmatpush1.bf16.msra.mxu0 0
    %665 = vmatprep.subr.bf16.mxu0 0
    %666 = vmatpush1.bf16.msra.mxu0 0
    %667 = vmatprep.subr.bf16.mxu0 0
    %668 = vmatpush1.bf16.msra.mxu0 0
    %669 = vmatprep.mubr.bf16.mxu0 0
    %670 = vmatmul.mubr.bf16.gmra.mrb[0].mxu0 %v626
    %v671 = vpop.f32.mrb[0].mxu0
    %v672 = vadd.f32 0.0, %v671
    %v673 = vpop.f32.mrb[0].mxu0
    %v674 = vadd.f32 0.0, %v673
    %v675 = vpop.f32.mrb[0].mxu0
    %v676 = vadd.f32 0.0, %v675
    %v677 = vpop.f32.mrb[0].mxu0
    %v678 = vadd.f32 0.0, %v677
    %679 = vmatprep.mubr.bf16.mxu0 0
    %680 = vmatmul.mubr.bf16.gmra.mrb[0].mxu0 %v629
    %v681 = vpop.f32.mrb[0].mxu0
    %v682 = vadd.f32 0.0, %v681
    %v683 = vpop.f32.mrb[0].mxu0
    %v684 = vadd.f32 0.0, %v683
    %v685 = vpop.f32.mrb[0].mxu0
    %v686 = vadd.f32 0.0, %v685
    %v687 = vpop.f32.mrb[0].mxu0
    %v688 = vadd.f32 0.0, %v687
    %689 = vdwg.mxu0
    %v690 = vadd.f32 %v596, %v672
    %v691 = vadd.f32 %v597, %v674
    %v692 = vadd.f32 %v598, %v676
    %v693 = vadd.f32 %v599, %v678
    %v694 = vadd.f32 %v600, %v682
    %v695 = vadd.f32 %v601, %v684
    %v696 = vadd.f32 %v602, %v686
    %v697 = vadd.f32 %v603, %v688
    %s698 = scalar_lea.vmem %s1, 112
    %v699 = vld [vmem:[%s698] sm:$0xf]
    %v700 = vld [vmem:[%s698 + $0x4] sm:$0xf]
    %v701 = vld [vmem:[%s698 + $0x8] sm:$0xf]
    %v702 = vld [vmem:[%s698 + $0xc] sm:$0xf]
    %v707 = vunpack.c.l.b16 %v699
    %v708 = vunpack.c.l.b16 %v700
    %v709 = vunpack.c.l.b16 %v701
    %v710 = vunpack.c.l.b16 %v702
    %v711 = vpack.c.b16 %v708, %v707
    %v712 = vpack.c.b16 %v710, %v709
    %713 = vrot.lane.b32.xlu0 %v44, 118
    %v714 = vpop.permute.xlu0 %713
    %715 = vrot.lane.b32.xlu0 %v45, 118
    %v716 = vpop.permute.xlu0 %715
    %vm717 = vcmask 965632
    %v718 = vsel %vm717, %v714, %v716
    %v720 = vsel %vm77, %v711, 0
    %v723 = vsel %vm77, %v712, 0
    %v726 = vsel %vm84, %v718, 0
    %v729 = vsel %vm84, %v716, 0
    %731 = vmatprep.subr.bf16.mxu0 %v729
    %732 = vmatpush1.bf16.msra.mxu0 %v726
    %733 = vmatprep.subr.bf16.mxu0 0
    %734 = vmatpush1.bf16.msra.mxu0 0
    %735 = vmatprep.subr.bf16.mxu0 0
    %736 = vmatpush1.bf16.msra.mxu0 0
    %737 = vmatprep.subr.bf16.mxu0 0
    %738 = vmatpush1.bf16.msra.mxu0 0
    %739 = vmatprep.subr.bf16.mxu0 0
    %740 = vmatpush1.bf16.msra.mxu0 0
    %741 = vmatprep.subr.bf16.mxu0 0
    %742 = vmatpush1.bf16.msra.mxu0 0
    %743 = vmatprep.subr.bf16.mxu0 0
    %744 = vmatpush1.bf16.msra.mxu0 0
    %745 = vmatprep.subr.bf16.mxu0 0
    %746 = vmatpush1.bf16.msra.mxu0 0
    %747 = vmatprep.subr.bf16.mxu0 0
    %748 = vmatpush1.bf16.msra.mxu0 0
    %749 = vmatprep.subr.bf16.mxu0 0
    %750 = vmatpush1.bf16.msra.mxu0 0
    %751 = vmatprep.subr.bf16.mxu0 0
    %752 = vmatpush1.bf16.msra.mxu0 0
    %753 = vmatprep.subr.bf16.mxu0 0
    %754 = vmatpush1.bf16.msra.mxu0 0
    %755 = vmatprep.subr.bf16.mxu0 0
    %756 = vmatpush1.bf16.msra.mxu0 0
    %757 = vmatprep.subr.bf16.mxu0 0
    %758 = vmatpush1.bf16.msra.mxu0 0
    %759 = vmatprep.subr.bf16.mxu0 0
    %760 = vmatpush1.bf16.msra.mxu0 0
    %761 = vmatprep.subr.bf16.mxu0 0
    %762 = vmatpush1.bf16.msra.mxu0 0
    %763 = vmatprep.mubr.bf16.mxu0 0
    %764 = vmatmul.mubr.bf16.gmra.mrb[0].mxu0 %v720
    %v765 = vpop.f32.mrb[0].mxu0
    %v766 = vadd.f32 0.0, %v765
    %v767 = vpop.f32.mrb[0].mxu0
    %v768 = vadd.f32 0.0, %v767
    %v769 = vpop.f32.mrb[0].mxu0
    %v770 = vadd.f32 0.0, %v769
    %v771 = vpop.f32.mrb[0].mxu0
    %v772 = vadd.f32 0.0, %v771
    %773 = vmatprep.mubr.bf16.mxu0 0
    %774 = vmatmul.mubr.bf16.gmra.mrb[0].mxu0 %v723
    %v775 = vpop.f32.mrb[0].mxu0
    %v776 = vadd.f32 0.0, %v775
    %v777 = vpop.f32.mrb[0].mxu0
    %v778 = vadd.f32 0.0, %v777
    %v779 = vpop.f32.mrb[0].mxu0
    %v780 = vadd.f32 0.0, %v779
    %v781 = vpop.f32.mrb[0].mxu0
    %v782 = vadd.f32 0.0, %v781
    %783 = vdwg.mxu0
    %v784 = vadd.f32 %v690, %v766
    %v785 = vadd.f32 %v691, %v768
    %v786 = vadd.f32 %v692, %v770
    %v787 = vadd.f32 %v693, %v772
    %v788 = vadd.f32 %v694, %v776
    %v789 = vadd.f32 %v695, %v778
    %v790 = vadd.f32 %v696, %v780
    %v791 = vadd.f32 %v697, %v782
    %s792 = scalar_lea.vmem %s1, 128
    %v793 = vld [vmem:[%s792] sm:$0xf]
    %v794 = vld [vmem:[%s792 + $0x4] sm:$0xf]
    %v795 = vld [vmem:[%s792 + $0x8] sm:$0xf]
    %v796 = vld [vmem:[%s792 + $0xc] sm:$0xf]
    %v801 = vunpack.c.l.b16 %v793
    %v802 = vunpack.c.l.b16 %v794
    %v803 = vunpack.c.l.b16 %v795
    %v804 = vunpack.c.l.b16 %v796
    %v805 = vpack.c.b16 %v802, %v801
    %v806 = vpack.c.b16 %v804, %v803
    %807 = vrot.lane.b32.xlu0 %v44, 117
    %v808 = vpop.permute.xlu0 %807
    %809 = vrot.lane.b32.xlu0 %v45, 117
    %v810 = vpop.permute.xlu0 %809
    %vm811 = vcmask 957440
    %v812 = vsel %vm811, %v808, %v810
    %v814 = vsel %vm77, %v805, 0
    %v817 = vsel %vm77, %v806, 0
    %v820 = vsel %vm84, %v812, 0
    %v823 = vsel %vm84, %v810, 0
    %825 = vmatprep.subr.bf16.mxu0 %v823
    %826 = vmatpush1.bf16.msra.mxu0 %v820
    %827 = vmatprep.subr.bf16.mxu0 0
    %828 = vmatpush1.bf16.msra.mxu0 0
    %829 = vmatprep.subr.bf16.mxu0 0
    %830 = vmatpush1.bf16.msra.mxu0 0
    %831 = vmatprep.subr.bf16.mxu0 0
    %832 = vmatpush1.bf16.msra.mxu0 0
    %833 = vmatprep.subr.bf16.mxu0 0
    %834 = vmatpush1.bf16.msra.mxu0 0
    %835 = vmatprep.subr.bf16.mxu0 0
    %836 = vmatpush1.bf16.msra.mxu0 0
    %837 = vmatprep.subr.bf16.mxu0 0
    %838 = vmatpush1.bf16.msra.mxu0 0
    %839 = vmatprep.subr.bf16.mxu0 0
    %840 = vmatpush1.bf16.msra.mxu0 0
    %841 = vmatprep.subr.bf16.mxu0 0
    %842 = vmatpush1.bf16.msra.mxu0 0
    %843 = vmatprep.subr.bf16.mxu0 0
    %844 = vmatpush1.bf16.msra.mxu0 0
    %845 = vmatprep.subr.bf16.mxu0 0
    %846 = vmatpush1.bf16.msra.mxu0 0
    %847 = vmatprep.subr.bf16.mxu0 0
    %848 = vmatpush1.bf16.msra.mxu0 0
    %849 = vmatprep.subr.bf16.mxu0 0
    %850 = vmatpush1.bf16.msra.mxu0 0
    %851 = vmatprep.subr.bf16.mxu0 0
    %852 = vmatpush1.bf16.msra.mxu0 0
    %853 = vmatprep.subr.bf16.mxu0 0
    %854 = vmatpush1.bf16.msra.mxu0 0
    %855 = vmatprep.subr.bf16.mxu0 0
    %856 = vmatpush1.bf16.msra.mxu0 0
    %857 = vmatprep.mubr.bf16.mxu0 0
    %858 = vmatmul.mubr.bf16.gmra.mrb[0].mxu0 %v814
    %v859 = vpop.f32.mrb[0].mxu0
    %v860 = vadd.f32 0.0, %v859
    %v861 = vpop.f32.mrb[0].mxu0
    %v862 = vadd.f32 0.0, %v861
    %v863 = vpop.f32.mrb[0].mxu0
    %v864 = vadd.f32 0.0, %v863
    %v865 = vpop.f32.mrb[0].mxu0
    %v866 = vadd.f32 0.0, %v865
    %867 = vmatprep.mubr.bf16.mxu0 0
    %868 = vmatmul.mubr.bf16.gmra.mrb[0].mxu0 %v817
    %v869 = vpop.f32.mrb[0].mxu0
    %v870 = vadd.f32 0.0, %v869
    %v871 = vpop.f32.mrb[0].mxu0
    %v872 = vadd.f32 0.0, %v871
    %v873 = vpop.f32.mrb[0].mxu0
    %v874 = vadd.f32 0.0, %v873
    %v875 = vpop.f32.mrb[0].mxu0
    %v876 = vadd.f32 0.0, %v875
    %877 = vdwg.mxu0
    %v878 = vadd.f32 %v784, %v860
    %v879 = vadd.f32 %v785, %v862
    %v880 = vadd.f32 %v786, %v864
    %v881 = vadd.f32 %v787, %v866
    %v882 = vadd.f32 %v788, %v870
    %v883 = vadd.f32 %v789, %v872
    %v884 = vadd.f32 %v790, %v874
    %v885 = vadd.f32 %v791, %v876
    %v886 = vld [vmem:[%s2] sm:$0xff]
    %v887 = vld [vmem:[%s2 + $0x8] sm:$0xff]
    %v888 = vld [vmem:[%s2 + $0x10] sm:$0xff]
    %v889 = vld [vmem:[%s2 + $0x18] sm:$0xff]
    %891 = vset.pattern.permute.xlu0 0
    %892 = vperm.xlu0 %891, %v886
    %v893 = vpop.permute.xlu0 %892
    %896 = vset.pattern.permute.xlu0 0
    %897 = vperm.xlu0 %896, %v887
    %v898 = vpop.permute.xlu0 %897
    %901 = vset.pattern.permute.xlu0 0
    %902 = vperm.xlu0 %901, %v888
    %v903 = vpop.permute.xlu0 %902
    %906 = vset.pattern.permute.xlu0 0
    %907 = vperm.xlu0 %906, %v889
    %v908 = vpop.permute.xlu0 %907
    %v910 = vadd.f32 %v878, %v893
    %v911 = vadd.f32 %v879, %v893
    %v912 = vadd.f32 %v880, %v898
    %v913 = vadd.f32 %v881, %v898
    %v914 = vadd.f32 %v882, %v903
    %v915 = vadd.f32 %v883, %v903
    %v916 = vadd.f32 %v884, %v908
    %v917 = vadd.f32 %v885, %v908
    %918 = vst [vmem:[#allocation2 + $0x8] sm:$0xff] %v910
    %vm919 = vcmask 588800
    %920 = vst.msk [vmem:[#allocation2 + $0x10] sm:$0xff] %vm919, %v911
    %921 = vst [vmem:[#allocation2 + $0x28] sm:$0xff] %v912
    %922 = vst.msk [vmem:[#allocation2 + $0x30] sm:$0xff] %vm919, %v913
    %923 = vst [vmem:[#allocation2 + $0x48] sm:$0xff] %v914
    %924 = vst.msk [vmem:[#allocation2 + $0x50] sm:$0xff] %vm919, %v915
    %925 = vst [vmem:[#allocation2 + $0x68] sm:$0xff] %v916
    %926 = vst.msk [vmem:[#allocation2 + $0x70] sm:$0xff] %vm919, %v917
    // Predicated region
    $region18: #{tpu_custom_call.1} parent=1 // pred_check
      _
    $region19: #{tpu_custom_call.1} parent=1 // pred_check_branch
      %928 = sbr.rel (0) target = $region21
    $region20: #{tpu_custom_call.1} parent=1 // pred_region
      %s930 = ssub.s32 2048, 2048
      %931 = vsyncadd [#allocation3], %s930
      %s932 = sshll.u32 [#allocation2], 4
      %s933 = int_to_ptr.vmem [resolvable:$true] %s932
      %938 = dma.vmem_to_hbm [thread:$0]  %s933, 2048, %s4, [#allocation3], 512, 512, 32
    $region21: #{tpu_custom_call.1} parent=1 // pred_fallthru
      _
    // Predicated region
    $region22: #{tpu_custom_call.1} parent=1 // pred_check
      _
    $region23: #{tpu_custom_call.1} parent=1 // pred_check_branch
      %940 = sbr.rel (0) target = $region25
    $region24: #{tpu_custom_call.1} parent=1 // pred_region
      %941 = dma.done [#allocation3], 2048
    $region25: #{tpu_custom_call.1} parent=1 // pred_fallthru
      _
    %942 = vsyncpa [#allocation3], 1

</llo_original>
